<compile_context>
chip_gen: v7x
topology: tpu7x:2x2x1
jax: 0.10.0
libtpu: 0.0.40
codegen_flags: <defaults>
</compile_context>

<pallas_src>
import functools

import jax
import jax.numpy as jnp
from jax.experimental import pallas as pl
from jax.experimental.pallas import tpu as pltpu


_ACT = {
    "tanh": jnp.tanh,
    "sigmoid": jax.nn.sigmoid,
    "relu": lambda v: jnp.maximum(v, 0.0),
    "sin": jnp.sin,
}
_ACT_BY_ID = {0: "tanh", 1: "sigmoid", 2: "relu", 3: "sin"}


# ----------------------------------------------------------------------------
# Kernel: one batch tile of the whole MLP (batch on the lane axis)
# ----------------------------------------------------------------------------
def _mlp_kernel(x_ref, w_ref, b_ref, o_ref, *, dims, act_name):
    """Fused MLP forward for one batch tile.

    x_ref: (d_in, block_n)       input, batch on lanes
    w_ref: (L, max_out, max_in)  zero-padded weight slab, PyTorch (out, in)
    b_ref: (L, max_out, 1)       zero-padded bias slab
    o_ref: (d_out, block_n)      output, batch on lanes
    """
    act = _ACT[act_name]
    num_layers = len(dims) - 1

    # Tiny constant slabs: load once per grid step, slice statically per layer.
    w_all = w_ref[...]
    b_all = b_ref[...]

    h = x_ref[...].astype(jnp.float32)                   # (d_in, block_n)
    for layer in range(num_layers):
        d_in, d_out = dims[layer], dims[layer + 1]
        w = w_all[layer, :d_out, :d_in]                  # (d_out, d_in)
        b = b_all[layer, :d_out, :]                      # (d_out, 1)

        if d_in <= 4:
            # Tiny-K layer (e.g. the 2-D PINN input): VPU broadcast FMAs,
            # skipping an MXU push/pop that would be pure fill/drain latency.
            y = w[:, 0:1] * h[0:1, :]
            for k in range(1, d_in):
                y = y + w[:, k:k + 1] * h[k:k + 1, :]
            y = y + b
        else:
            y = jnp.dot(w, h, preferred_element_type=jnp.float32) + b

        if layer != num_layers - 1:                      # no act after last layer
            y = act(y)
        h = y

    o_ref[...] = h.astype(o_ref.dtype)                   # lane-dense store


# ----------------------------------------------------------------------------
# Wrapper
# ----------------------------------------------------------------------------
def net_forward(x, weights, biases, act_name="tanh", block_n=None):
    """Pallas implementation of Net.forward.

    x:       (N, d_in) float32
    weights: list of PyTorch-layout (d_{i+1}, d_i) arrays
    biases:  list of (d_{i+1},) arrays
    """
    n, d_in = x.shape
    num_layers = len(weights)
    dims = tuple([d_in] + [w.shape[0] for w in weights])
    d_out = dims[-1]

    # Batch tile: big (amortize per-step overhead), lane-aligned, but keep at
    # least 2 grid steps once the batch allows it (v7x megacore sees a
    # "parallel" axis it can split).  Per-tile VMEM in this layout is tiny
    # (< 1 MiB at block_n=2048), far below every generation's scoped limit.
    if block_n is None:
        target = pl.cdiv(n, 2) if n >= 256 else n
        block_n = max(128, min(2048, pl.cdiv(target, 128) * 128))
    n_pad = pl.cdiv(n, block_n) * block_n

    # Transpose to batch-on-lanes and pad the ragged batch.
    xt = jnp.asarray(x, jnp.float32).T                   # (d_in, N)
    if n_pad != n:
        xt = jnp.pad(xt, ((0, 0), (0, n_pad - n)))

    # Pack all layer params into two small zero-padded slabs (3 operands
    # total instead of 1 + 2*L -> fewer DMA descriptors / double buffers).
    max_out = max(dims[1:])
    max_in = max(dims[:-1])
    w_slab = jnp.zeros((num_layers, max_out, max_in), jnp.float32)
    b_slab = jnp.zeros((num_layers, max_out, 1), jnp.float32)
    for l, (w, b) in enumerate(zip(weights, biases)):
        w_slab = w_slab.at[l, :w.shape[0], :w.shape[1]].set(
            jnp.asarray(w, jnp.float32))
        b_slab = b_slab.at[l, :b.shape[0], 0].set(jnp.asarray(b, jnp.float32))

    kernel = functools.partial(_mlp_kernel, dims=dims, act_name=act_name)

    out_t = pl.pallas_call(
        kernel,
        out_shape=jax.ShapeDtypeStruct((d_out, n_pad), x.dtype),
        grid_spec=pltpu.PrefetchScalarGridSpec(
            num_scalar_prefetch=0,
            grid=(n_pad // block_n,),
            in_specs=[
                pl.BlockSpec((d_in, block_n), lambda i: (0, i)),
                pl.BlockSpec(w_slab.shape, lambda i: (0, 0, 0)),
                pl.BlockSpec(b_slab.shape, lambda i: (0, 0, 0)),
            ],
            out_specs=pl.BlockSpec((d_out, block_n), lambda i: (0, i)),
        ),
        compiler_params=pltpu.CompilerParams(
            dimension_semantics=("parallel",)),
    )(xt, w_slab, b_slab)

    return out_t[:, :n].T                                # back to (N, d_out)


# ----------------------------------------------------------------------------
# Deterministic parameter init (mirrors nn.Linear default: U(-1/sqrt(in), +))
# Weights are kept in PyTorch-native (out, in) layout.
# ----------------------------------------------------------------------------
def init_params(key, nn_layers):
    weights, biases = [], []
    for i in range(len(nn_layers) - 1):
        fan_in, fan_out = nn_layers[i], nn_layers[i + 1]
        key, kw, kb = jax.random.split(key, 3)
        bound = 1.0 / jnp.sqrt(jnp.float32(fan_in))
        weights.append(jax.random.uniform(kw, (fan_out, fan_in),
                                          jnp.float32, -bound, bound))
        biases.append(jax.random.uniform(kb, (fan_out,),
                                         jnp.float32, -bound, bound))
    return weights, biases


def ref_forward(x, weights, biases, act_name="tanh"):
    act = _ACT[act_name]
    h = x
    for i, (w, b) in enumerate(zip(weights, biases)):
        h = h @ w.T + b
        if i != len(weights) - 1:
            h = act(h)
    return h


if __name__ == "__main__":
    nn_layers = [2, 32, 32, 1]   # 2-D PINN input -> hidden -> scalar output
    act_fun = 0                  # 0: Tanh (matches af_list in the module)
    act_name = _ACT_BY_ID[act_fun]

    key = jax.random.PRNGKey(0)
    key, kx = jax.random.split(key)
    n = 300                      # not a multiple of 128 -> exercises padding
    x = jax.random.uniform(kx, (n, nn_layers[0]), jnp.float32)

    weights, biases = init_params(key, nn_layers)

    out = net_forward(x, weights, biases, act_name=act_name)
    out = jax.block_until_ready(out)

    expected = ref_forward(x, weights, biases, act_name=act_name)
    assert out.shape == (n, nn_layers[-1]), out.shape
    assert jnp.allclose(out, expected, atol=1e-5, rtol=1e-5)

    print("KERNEL_OK")
</pallas_src>

<mosaic_0001>
module attributes {stable_mosaic.version = 11 : i64} {
  func.func @_mlp_kernel(%arg0: i32, %arg1: memref<2x256xf32, #tpu.memory_space<vmem>>, %arg2: memref<3x32x32xf32, #tpu.memory_space<vmem>>, %arg3: memref<3x32x1xf32, #tpu.memory_space<vmem>>, %arg4: memref<1x256xf32, #tpu.memory_space<vmem>>) attributes {dimension_semantics = [#tpu.dimension_semantics<parallel>], iteration_bounds = array<i64: 2>, scalar_prefetch = 0 : i64, scratch_operands = 0 : i64, tpu.core_type = #tpu.core_type<tc>, window_params = [{transform_indices = @transform_0, window_bounds = array<i64: 2, 256>}, {pipeline_mode = #tpu.pipeline_mode<synchronous>, transform_indices = @transform_1, window_bounds = array<i64: 3, 32, 32>}, {pipeline_mode = #tpu.pipeline_mode<synchronous>, transform_indices = @transform_2, window_bounds = array<i64: 3, 32, 1>}, {transform_indices = @transform_3, window_bounds = array<i64: 1, 256>}]} {
    %c0 = arith.constant 0 : index
    %c0_0 = arith.constant 0 : index
    %c0_1 = arith.constant 0 : index
    %0 = vector.load %arg2[%c0, %c0_0, %c0_1] : memref<3x32x32xf32, #tpu.memory_space<vmem>>, vector<3x32x32xf32>
    %c0_2 = arith.constant 0 : index
    %c0_3 = arith.constant 0 : index
    %c0_4 = arith.constant 0 : index
    %1 = vector.load %arg3[%c0_2, %c0_3, %c0_4] : memref<3x32x1xf32, #tpu.memory_space<vmem>>, vector<3x32x1xf32>
    %c0_5 = arith.constant 0 : index
    %c0_6 = arith.constant 0 : index
    %2 = vector.load %arg1[%c0_5, %c0_6] : memref<2x256xf32, #tpu.memory_space<vmem>>, vector<2x256xf32>
    %3 = vector.extract_strided_slice %0 {offsets = [0, 0, 0], sizes = [1, 32, 2], strides = [1, 1, 1]} : vector<3x32x32xf32> to vector<1x32x2xf32>
    %4 = vector.shape_cast %3 : vector<1x32x2xf32> to vector<32x2xf32>
    %5 = vector.extract_strided_slice %1 {offsets = [0, 0, 0], sizes = [1, 32, 1], strides = [1, 1, 1]} : vector<3x32x1xf32> to vector<1x32x1xf32>
    %6 = vector.shape_cast %5 : vector<1x32x1xf32> to vector<32x1xf32>
    %7 = vector.extract_strided_slice %4 {offsets = [0, 0], sizes = [32, 1], strides = [1, 1]} : vector<32x2xf32> to vector<32x1xf32>
    %8 = vector.extract_strided_slice %2 {offsets = [0, 0], sizes = [1, 256], strides = [1, 1]} : vector<2x256xf32> to vector<1x256xf32>
    %9 = vector.broadcast %7 : vector<32x1xf32> to vector<32x256xf32>
    %10 = vector.broadcast %8 : vector<1x256xf32> to vector<32x256xf32>
    %11 = arith.mulf %9, %10 : vector<32x256xf32>
    %12 = vector.extract_strided_slice %4 {offsets = [0, 1], sizes = [32, 1], strides = [1, 1]} : vector<32x2xf32> to vector<32x1xf32>
    %13 = vector.extract_strided_slice %2 {offsets = [1, 0], sizes = [1, 256], strides = [1, 1]} : vector<2x256xf32> to vector<1x256xf32>
    %14 = vector.broadcast %12 : vector<32x1xf32> to vector<32x256xf32>
    %15 = vector.broadcast %13 : vector<1x256xf32> to vector<32x256xf32>
    %16 = arith.mulf %14, %15 : vector<32x256xf32>
    %17 = arith.addf %11, %16 : vector<32x256xf32>
    %18 = vector.broadcast %6 : vector<32x1xf32> to vector<32x256xf32>
    %19 = arith.addf %17, %18 : vector<32x256xf32>
    %20 = math.tanh %19 : vector<32x256xf32>
    %21 = vector.extract_strided_slice %0 {offsets = [1, 0, 0], sizes = [1, 32, 32], strides = [1, 1, 1]} : vector<3x32x32xf32> to vector<1x32x32xf32>
    %22 = vector.shape_cast %21 : vector<1x32x32xf32> to vector<32x32xf32>
    %23 = vector.extract_strided_slice %1 {offsets = [1, 0, 0], sizes = [1, 32, 1], strides = [1, 1, 1]} : vector<3x32x1xf32> to vector<1x32x1xf32>
    %24 = vector.shape_cast %23 : vector<1x32x1xf32> to vector<32x1xf32>
    %cst = arith.constant dense<0.000000e+00> : vector<32x256xf32>
    %25 = tpu.matmul %22, %20, %cst {dimension_numbers = #tpu.dot_dimension_numbers<[1], [0], [0], [1], [0, 0, 1, 1], [], []>} : vector<32x32xf32>, vector<32x256xf32>, vector<32x256xf32> -> vector<32x256xf32>
    %26 = vector.broadcast %24 : vector<32x1xf32> to vector<32x256xf32>
    %27 = arith.addf %25, %26 : vector<32x256xf32>
    %28 = math.tanh %27 : vector<32x256xf32>
    %29 = vector.extract_strided_slice %0 {offsets = [2, 0, 0], sizes = [1, 1, 32], strides = [1, 1, 1]} : vector<3x32x32xf32> to vector<1x1x32xf32>
    %30 = vector.shape_cast %29 : vector<1x1x32xf32> to vector<1x32xf32>
    %31 = vector.extract_strided_slice %1 {offsets = [2, 0, 0], sizes = [1, 1, 1], strides = [1, 1, 1]} : vector<3x32x1xf32> to vector<1x1x1xf32>
    %32 = vector.shape_cast %31 : vector<1x1x1xf32> to vector<1x1xf32>
    %cst_7 = arith.constant dense<0.000000e+00> : vector<1x256xf32>
    %33 = tpu.matmul %30, %28, %cst_7 {dimension_numbers = #tpu.dot_dimension_numbers<[1], [0], [0], [1], [0, 0, 1, 1], [], []>} : vector<1x32xf32>, vector<32x256xf32>, vector<1x256xf32> -> vector<1x256xf32>
    %34 = vector.broadcast %32 : vector<1x1xf32> to vector<1x256xf32>
    %35 = arith.addf %33, %34 : vector<1x256xf32>
    %c0_8 = arith.constant 0 : index
    %c0_9 = arith.constant 0 : index
    %36 = vector.load %arg4[%c0_8, %c0_9] : memref<1x256xf32, #tpu.memory_space<vmem>>, vector<1x256xf32>
    tpu.vector_store %arg4[%c0_8, %c0_9], %35 {strides = array<i32>} : memref<1x256xf32, #tpu.memory_space<vmem>>, vector<1x256xf32>,
    return
  }
  func.func @transform_0(%arg0: i32) -> (i32, i32) {
    %c0_i32 = arith.constant 0 : i32
    %c0_i32_0 = arith.constant 0 : i32
    return %c0_i32, %arg0 : i32, i32
  }
  func.func @transform_1(%arg0: i32) -> (i32, i32, i32) {
    %c0_i32 = arith.constant 0 : i32
    %c0_i32_0 = arith.constant 0 : i32
    %c0_i32_1 = arith.constant 0 : i32
    %c0_i32_2 = arith.constant 0 : i32
    return %c0_i32, %c0_i32_0, %c0_i32_1 : i32, i32, i32
  }
  func.func @transform_2(%arg0: i32) -> (i32, i32, i32) {
    %c0_i32 = arith.constant 0 : i32
    %c0_i32_0 = arith.constant 0 : i32
    %c0_i32_1 = arith.constant 0 : i32
    %c0_i32_2 = arith.constant 0 : i32
    return %c0_i32, %c0_i32_0, %c0_i32_1 : i32, i32, i32
  }
  func.func @transform_3(%arg0: i32) -> (i32, i32) {
    %c0_i32 = arith.constant 0 : i32
    %c0_i32_0 = arith.constant 0 : i32
    return %c0_i32, %arg0 : i32, i32
  }
}

</mosaic_0001>

<llo_original>
// kernel: tpu_custom_call.1
$region0: #{tpu_custom_call.1}
  #allocation0 [shape = 'u32[]', space=smem, size = 0x4, offset = 0x4, fixed_abs, tag = 'smem constant byte address 0x4 - core index']
  #allocation1 [shape = 'u32[144,128]{1,0:T(1,128)}', space=vmem, size = 0x12000, scoped, tag = 'internal scratch']
  %s0 = inlined_call_operand.hbm [shape: f32[2,512], index: 0, kind: input, shape index: {}]
  %s1 = inlined_call_operand.vmem [shape: f32[3,32,32], index: 1, kind: input, shape index: {}]
  %s2 = inlined_call_operand.vmem [shape: f32[3,32,1], index: 2, kind: input, shape index: {}]
  %s3 = inlined_call_operand.hbm [shape: f32[1,512], index: 3, kind: output, shape index: {}]
  %s4 = sld [smem:[#allocation0]]
  $region49: #{tpu_custom_call.1} parent=0
    _
  %s6 = ssub.s32 1, %s4
  %s7 = scalar_select 0, %s6, %s4
  $region1: #{tpu_custom_call.1} parent=0
    #allocation2 [shape = 'u8[4096]{0}', space=vmem, size = 0x1000, scoped, tag = 'input window, operand 0']
    #allocation3 [shape = 's32[2]{0}', space=sflag, size = 0x8, scoped, tag = 'scoped memory for tpu_custom_call.1']
    #allocation4 [shape = 's32[2]{0}', space=sflag, size = 0x8, scoped, tag = 'scoped memory for tpu_custom_call.1']
    #allocation5 [shape = 'u8[2048]{0}', space=vmem, size = 0x800, scoped, tag = 'output window, operand 0']
    %8 = vsyncpa [#allocation3], 0
    %s9 = scalar_lea.sflag [#allocation3], 1
    %10 = vsyncpa %s9, 0
    %11 = vsyncpa [#allocation4], 0
    %s12 = scalar_lea.sflag [#allocation4], 1
    %13 = vsyncpa %s12, 0
    loop: start=0, step=1, limit=4
    $region2: #{tpu_custom_call.1} parent=1 // loop_pre_header
      _
    $region3: #{tpu_custom_call.1} parent=1 // loop_header
      %s15 = sphi 0, %s19
      %p16 = scmp.ge.s32.totalorder %s15, 4
      %s25 = sphi 0, %s27
      %s28 = sphi 0, %s25
      %s29 = sphi 0, %s28
      %s45 = sphi 0, %s29
      %s49 = sphi 0, %s49
      %s51 = sphi 0, %s49
      %s52 = sphi 0, %s51
      %s66 = sphi 0, %s52
      %s70 = sphi 0, %s70
      %s72 = sphi 0, %s70
      %s73 = sphi 0, %s72
      %s87 = sphi 0, %s73
      %s93 = sphi 0, %s95
      %s96 = sphi 0, %s93
      %s97 = sphi 0, %s96
      %s113 = sphi 0, %s97
    $region4: #{tpu_custom_call.1} parent=1 // loop_header_branch
      %18 = sbr.rel (%p16) target = $region8
    $region5: #{tpu_custom_call.1} parent=1 // loop_body
      %s20 = ssub.s32 %s15, 1
      %s21 = ssub.s32 %s15, 2
      %s22 = sadd.s32 %s15, 1
      %s23 = ssub.s32 %s15, %s22
      %p24 = scmp.eq.s32.totalorder %s23, 0
      %s26 = sadd.s32 %s25, 1
      %s27 = scalar_select %p24, %s25, %s26
      %p30 = pneg %p24
      %p31 = scmp.eq.s32.totalorder %s15, 1
      %p32 = por %p30, %p31
      %p33 = scmp.ne.s32.totalorder %s25, %s28
      %p34 = scmp.eq.s32.totalorder %s15, 0
      %p35 = por %p33, %p34
      %p36 = scmp.ne.s32.totalorder %s25, %s28
      %p37 = scmp.eq.s32.totalorder %s20, 1
      %p38 = por %p36, %p37
      %p39 = scmp.ne.s32.totalorder %s28, %s29
      %p40 = scmp.eq.s32.totalorder %s20, 0
      %p41 = por %p39, %p40
      %p42 = scmp.ne.s32.totalorder %s28, %s29
      %p43 = scmp.eq.s32.totalorder %s21, 1
      %p44 = por %p42, %p43
      %p46 = scmp.ne.s32.totalorder %s29, %s45
      %p47 = scmp.eq.s32.totalorder %s21, 0
      %p48 = por %p46, %p47
      %s50 = sadd.s32 %s49, 1
      %p53 = scmp.eq.s32.totalorder %s15, 1
      %p54 = scmp.ne.s32.totalorder %s49, %s51
      %p55 = scmp.eq.s32.totalorder %s15, 0
      %p56 = por %p54, %p55
      %p57 = scmp.ne.s32.totalorder %s49, %s51
      %p58 = scmp.eq.s32.totalorder %s20, 1
      %p59 = por %p57, %p58
      %p60 = scmp.ne.s32.totalorder %s51, %s52
      %p61 = scmp.eq.s32.totalorder %s20, 0
      %p62 = por %p60, %p61
      %p63 = scmp.ne.s32.totalorder %s51, %s52
      %p64 = scmp.eq.s32.totalorder %s21, 1
      %p65 = por %p63, %p64
      %p67 = scmp.ne.s32.totalorder %s52, %s66
      %p68 = scmp.eq.s32.totalorder %s21, 0
      %p69 = por %p67, %p68
      %s71 = sadd.s32 %s70, 1
      %p74 = scmp.eq.s32.totalorder %s15, 1
      %p75 = scmp.ne.s32.totalorder %s70, %s72
      %p76 = scmp.eq.s32.totalorder %s15, 0
      %p77 = por %p75, %p76
      %p78 = scmp.ne.s32.totalorder %s70, %s72
      %p79 = scmp.eq.s32.totalorder %s20, 1
      %p80 = por %p78, %p79
      %p81 = scmp.ne.s32.totalorder %s72, %s73
      %p82 = scmp.eq.s32.totalorder %s20, 0
      %p83 = por %p81, %p82
      %p84 = scmp.ne.s32.totalorder %s72, %s73
      %p85 = scmp.eq.s32.totalorder %s21, 1
      %p86 = por %p84, %p85
      %p88 = scmp.ne.s32.totalorder %s73, %s87
      %p89 = scmp.eq.s32.totalorder %s21, 0
      %p90 = por %p88, %p89
      %s91 = ssub.s32 %s15, %s22
      %p92 = scmp.eq.s32.totalorder %s91, 0
      %s94 = sadd.s32 %s93, 1
      %s95 = scalar_select %p92, %s93, %s94
      %p98 = pneg %p92
      %p99 = scmp.eq.s32.totalorder %s15, 1
      %p100 = por %p98, %p99
      %p101 = scmp.ne.s32.totalorder %s93, %s96
      %p102 = scmp.eq.s32.totalorder %s15, 0
      %p103 = por %p101, %p102
      %p104 = scmp.ne.s32.totalorder %s93, %s96
      %p105 = scmp.eq.s32.totalorder %s20, 1
      %p106 = por %p104, %p105
      %p107 = scmp.ne.s32.totalorder %s96, %s97
      %p108 = scmp.eq.s32.totalorder %s20, 0
      %p109 = por %p107, %p108
      %p110 = scmp.ne.s32.totalorder %s96, %s97
      %p111 = scmp.eq.s32.totalorder %s21, 1
      %p112 = por %p110, %p111
      %p114 = scmp.ne.s32.totalorder %s97, %s113
      %p115 = scmp.eq.s32.totalorder %s21, 0
      %p116 = por %p114, %p115
      %p117 = scmp.le.s32.totalorder 1, %s15
      %p118 = scmp.lt.s32.totalorder %s15, 3
      %p119 = pnand %p117, %p118
      %p120 = pneg %p119
      // Predicated region
      $region9: #{tpu_custom_call.1} parent=5 // pred_check
        _
      $region10: #{tpu_custom_call.1} parent=5 // pred_check_branch
        %122 = sbr.rel (%p119) target = $region12
      $region11: #{tpu_custom_call.1} parent=5 // pred_region
        %s123 = ssub.s32 %s15, 1
        // Predicated region
        $region13: #{tpu_custom_call.1} parent=11 // pred_check
          %p124 = pneg %p62
        $region14: #{tpu_custom_call.1} parent=11 // pred_check_branch
          %126 = sbr.rel (%p124) target = $region16
        $region15: #{tpu_custom_call.1} parent=11 // pred_region
          _
        $region16: #{tpu_custom_call.1} parent=11 // pred_fallthru
          _
        // Predicated region
        $region17: #{tpu_custom_call.1} parent=11 // pred_check
          %p127 = pneg %p83
        $region18: #{tpu_custom_call.1} parent=11 // pred_check_branch
          %129 = sbr.rel (%p127) target = $region20
        $region19: #{tpu_custom_call.1} parent=11 // pred_region
          _
        $region20: #{tpu_custom_call.1} parent=11 // pred_fallthru
          _
      $region12: #{tpu_custom_call.1} parent=5 // pred_fallthru
        _
      %p130 = scmp.lt.s32.totalorder %s15, 2
      // Predicated region
      $region21: #{tpu_custom_call.1} parent=5 // pred_check
        %p131 = pneg %p130
      $region22: #{tpu_custom_call.1} parent=5 // pred_check_branch
        %133 = sbr.rel (%p131) target = $region24
      $region23: #{tpu_custom_call.1} parent=5 // pred_region
        // Predicated region
        $region25: #{tpu_custom_call.1} parent=23 // pred_check
          %p134 = pneg %p35
        $region26: #{tpu_custom_call.1} parent=23 // pred_check_branch
          %136 = sbr.rel (%p134) target = $region28
        $region27: #{tpu_custom_call.1} parent=23 // pred_region
          %s137 = sand.u32 %s25, 1
          %s138 = scalar_lea.sflag [#allocation3], %s137
          %s139 = sand.u32 %s25, 1
          %s140 = smul.addr %s139, 4
          %s141 = scalar_lea.vmem [#allocation2], %s140
          %s142 = smul.u32 2, %s15
          %s144 = ssub.s32 64, 64
          %145 = vsyncadd %s138, %s144
          %s146 = smul.addr %s142, 32
          %s147 = scalar_lea.hbm %s0, %s146
          %s149 = sshll.u32 %s141, 4
          %s150 = int_to_ptr.vmem [resolvable:$true] %s149
          %152 = dma.hbm_to_vmem [thread:$0]  %s147, 64, %s150, %s138
        $region28: #{tpu_custom_call.1} parent=23 // pred_fallthru
          _
      $region24: #{tpu_custom_call.1} parent=5 // pred_fallthru
        _
      %p153 = scmp.le.s32.totalorder 1, %s15
      %p154 = scmp.lt.s32.totalorder %s15, 3
      %p155 = pnand %p153, %p154
      %p156 = pneg %p155
      // Predicated region
      $region29: #{tpu_custom_call.1} parent=5 // pred_check
        _
      $region30: #{tpu_custom_call.1} parent=5 // pred_check_branch
        %158 = sbr.rel (%p155) target = $region32
      $region31: #{tpu_custom_call.1} parent=5 // pred_region
        %s159 = ssub.s32 %s15, 1
        %s160 = sand.u32 %s28, 1
        %s161 = scalar_lea.sflag [#allocation3], %s160
        %s162 = sand.u32 %s28, 1
        %s163 = smul.addr %s162, 4
        %s164 = scalar_lea.vmem [#allocation2], %s163
        // Predicated region
        $region33: #{tpu_custom_call.1} parent=31 // pred_check
          %p165 = pneg %p41
        $region34: #{tpu_custom_call.1} parent=31 // pred_check_branch
          %167 = sbr.rel (%p165) target = $region36
        $region35: #{tpu_custom_call.1} parent=31 // pred_region
          %168 = dma.done %s161, 64
        $region36: #{tpu_custom_call.1} parent=31 // pred_fallthru
          _
        %s169 = sand.u32 %s28, 1
        %s170 = scalar_lea.sflag [#allocation3], %s169
        %s171 = sand.u32 %s28, 1
        %s172 = smul.addr %s171, 4
        %s173 = scalar_lea.vmem [#allocation2], %s172
        %p174 = pneg %p41
        %p175 = pneg %p38
        %p176 = pneg %p62
        %p177 = pneg %p59
        %p178 = pneg %p83
        %p179 = pneg %p80
        %p180 = pneg %p109
        %p181 = pneg %p106
        %s182 = sand.u32 %s96, 1
        %s183 = scalar_lea.sflag [#allocation4], %s182
        %s184 = sand.u32 %s96, 1
        %s185 = smul.addr %s184, 2
        %s186 = scalar_lea.vmem [#allocation5], %s185
        %s187 = smul.u32 2, %s20
        %s188 = smul.u32 2, %s20
        %v189 = vld [vmem:[%s1] sm:$0xff]
        %v190 = vld [vmem:[%s1 + $0x8] sm:$0xff]
        %v191 = vld [vmem:[%s1 + $0x10] sm:$0xff]
        %v192 = vld [vmem:[%s1 + $0x18] sm:$0xff]
        %v193 = vld [vmem:[%s1 + $0x20] sm:$0xff]
        %v194 = vld [vmem:[%s1 + $0x28] sm:$0xff]
        %v195 = vld [vmem:[%s1 + $0x30] sm:$0xff]
        %v196 = vld [vmem:[%s1 + $0x38] sm:$0xff]
        %v197 = vld [vmem:[%s1 + $0x40] sm:$0xff]
        %v198 = vld [vmem:[%s2] sm:$0xff]
        %v199 = vld [vmem:[%s2 + $0x8] sm:$0xff]
        %v200 = vld [vmem:[%s2 + $0x10] sm:$0xff]
        %v201 = vld [vmem:[%s2 + $0x18] sm:$0xff]
        %v202 = vld [vmem:[%s2 + $0x20] sm:$0xff]
        %v203 = vld [vmem:[%s2 + $0x28] sm:$0xff]
        %v204 = vld [vmem:[%s2 + $0x30] sm:$0xff]
        %v205 = vld [vmem:[%s2 + $0x38] sm:$0xff]
        %v206 = vld [vmem:[%s2 + $0x40] sm:$0xff]
        %v207 = vld [vmem:[%s164] sm:$0xf]
        %209 = vset.pattern.permute.xlu0 0
        %210 = vperm.xlu0 %209, %v189
        %v211 = vpop.permute.xlu0 %210
        %214 = vset.pattern.permute.xlu0 0
        %215 = vperm.xlu0 %214, %v190
        %v216 = vpop.permute.xlu0 %215
        %219 = vset.pattern.permute.xlu0 0
        %220 = vperm.xlu0 %219, %v191
        %v221 = vpop.permute.xlu0 %220
        %224 = vset.pattern.permute.xlu0 0
        %225 = vperm.xlu0 %224, %v192
        %v226 = vpop.permute.xlu0 %225
        %v229 = vlaneseq
        %v230 = vshrl.u32 %v229, 7
        %v231 = vsub.s32 0, %v230
        %v232 = vrot.slane %v207, %v231
        %v233 = vlaneseq
        %v234 = vshrl.u32 %v233, 7
        %v235 = vsub.s32 2, %v234
        %v236 = vrot.slane %v207, %v235
        %v239 = vlaneseq
        %v240 = vshrl.u32 %v239, 7
        %v241 = vsub.s32 0, %v240
        %v242 = vrot.slane %v232, %v241
        %v243 = vlaneseq
        %v244 = vshrl.u32 %v243, 7
        %v245 = vsub.s32 0, %v244
        %v246 = vrot.slane %v236, %v245
        %v247 = vmul.f32 %v211, %v242
        %v248 = vmul.f32 %v211, %v246
        %v249 = vmul.f32 %v216, %v242
        %v250 = vmul.f32 %v216, %v246
        %v251 = vmul.f32 %v221, %v242
        %v252 = vmul.f32 %v221, %v246
        %v253 = vmul.f32 %v226, %v242
        %v254 = vmul.f32 %v226, %v246
        %255 = vset.pattern.permute.xlu0 1
        %256 = vperm.xlu0 %255, %v189
        %v257 = vpop.permute.xlu0 %256
        %259 = vset.pattern.permute.xlu0 1
        %260 = vperm.xlu0 %259, %v190
        %v261 = vpop.permute.xlu0 %260
        %263 = vset.pattern.permute.xlu0 1
        %264 = vperm.xlu0 %263, %v191
        %v265 = vpop.permute.xlu0 %264
        %267 = vset.pattern.permute.xlu0 1
        %268 = vperm.xlu0 %267, %v192
        %v269 = vpop.permute.xlu0 %268
        %v271 = vlaneseq
        %v272 = vshrl.u32 %v271, 7
        %v273 = vsub.s32 1, %v272
        %v274 = vrot.slane %v207, %v273
        %v275 = vlaneseq
        %v276 = vshrl.u32 %v275, 7
        %v277 = vsub.s32 3, %v276
        %v278 = vrot.slane %v207, %v277
        %v281 = vlaneseq
        %v282 = vshrl.u32 %v281, 7
        %v283 = vsub.s32 1, %v282
        %v284 = vrot.slane %v274, %v283
        %v285 = vlaneseq
        %v286 = vshrl.u32 %v285, 7
        %v287 = vsub.s32 1, %v286
        %v288 = vrot.slane %v278, %v287
        %v289 = vmul.f32 %v257, %v284
        %v290 = vmul.f32 %v257, %v288
        %v291 = vmul.f32 %v261, %v284
        %v292 = vmul.f32 %v261, %v288
        %v293 = vmul.f32 %v265, %v284
        %v294 = vmul.f32 %v265, %v288
        %v295 = vmul.f32 %v269, %v284
        %v296 = vmul.f32 %v269, %v288
        %v297 = vadd.f32 %v247, %v289
        %v298 = vadd.f32 %v248, %v290
        %v299 = vadd.f32 %v249, %v291
        %v300 = vadd.f32 %v250, %v292
        %v301 = vadd.f32 %v251, %v293
        %v302 = vadd.f32 %v252, %v294
        %v303 = vadd.f32 %v253, %v295
        %v304 = vadd.f32 %v254, %v296
        %306 = vset.pattern.permute.xlu0 0
        %307 = vperm.xlu0 %306, %v198
        %v308 = vpop.permute.xlu0 %307
        %311 = vset.pattern.permute.xlu0 0
        %312 = vperm.xlu0 %311, %v199
        %v313 = vpop.permute.xlu0 %312
        %316 = vset.pattern.permute.xlu0 0
        %317 = vperm.xlu0 %316, %v200
        %v318 = vpop.permute.xlu0 %317
        %321 = vset.pattern.permute.xlu0 0
        %322 = vperm.xlu0 %321, %v201
        %v323 = vpop.permute.xlu0 %322
        %v325 = vadd.f32 %v297, %v308
        %v326 = vadd.f32 %v298, %v308
        %v327 = vadd.f32 %v299, %v313
        %v328 = vadd.f32 %v300, %v313
        %v329 = vadd.f32 %v301, %v318
        %v330 = vadd.f32 %v302, %v318
        %v331 = vadd.f32 %v303, %v323
        %v332 = vadd.f32 %v304, %v323
        %v333 = vtanh.pop %v325
        %v334 = vtanh.pop %v326
        %v335 = vtanh.pop %v327
        %v336 = vtanh.pop %v328
        %v337 = vtanh.pop %v329
        %v338 = vtanh.pop %v330
        %v339 = vtanh.pop %v331
        %v340 = vtanh.pop %v332
        %342 = vset.pattern.permute.xlu0 0
        %343 = vperm.xlu0 %342, %v202
        %v344 = vpop.permute.xlu0 %343
        %347 = vset.pattern.permute.xlu0 0
        %348 = vperm.xlu0 %347, %v203
        %v349 = vpop.permute.xlu0 %348
        %352 = vset.pattern.permute.xlu0 0
        %353 = vperm.xlu0 %352, %v204
        %v354 = vpop.permute.xlu0 %353
        %357 = vset.pattern.permute.xlu0 0
        %358 = vperm.xlu0 %357, %v205
        %v359 = vpop.permute.xlu0 %358
        %vm361 = vcmask 261120
        %v363 = vsel %vm361, %v193, 0
        %v366 = vsel %vm361, %v194, 0
        %v369 = vsel %vm361, %v195, 0
        %v372 = vsel %vm361, %v196, 0
        %374 = vmatprep.subr.mxu0 %v334
        %375 = vmatpush1.msra.mxu0 %v333
        %376 = vmatprep.subr.mxu0 %v336
        %377 = vmatpush1.msra.mxu0 %v335
        %378 = vmatprep.subr.mxu0 %v338
        %379 = vmatpush1.msra.mxu0 %v337
        %380 = vmatprep.subr.mxu0 %v340
        %381 = vmatpush1.msra.mxu0 %v339
        %382 = vmatprep.subr.mxu0 0.0
        %383 = vmatpush1.msra.mxu0 0.0
        %384 = vmatprep.subr.mxu0 0.0
        %385 = vmatpush1.msra.mxu0 0.0
        %386 = vmatprep.subr.mxu0 0.0
        %387 = vmatpush1.msra.mxu0 0.0
        %388 = vmatprep.subr.mxu0 0.0
        %389 = vmatpush1.msra.mxu0 0.0
        %390 = vmatprep.subr.mxu0 0.0
        %391 = vmatpush1.msra.mxu0 0.0
        %392 = vmatprep.subr.mxu0 0.0
        %393 = vmatpush1.msra.mxu0 0.0
        %394 = vmatprep.subr.mxu0 0.0
        %395 = vmatpush1.msra.mxu0 0.0
        %396 = vmatprep.subr.mxu0 0.0
        %397 = vmatpush1.msra.mxu0 0.0
        %398 = vmatprep.subr.mxu0 0.0
        %399 = vmatpush1.msra.mxu0 0.0
        %400 = vmatprep.subr.mxu0 0.0
        %401 = vmatpush1.msra.mxu0 0.0
        %402 = vmatprep.subr.mxu0 0.0
        %403 = vmatpush1.msra.mxu0 0.0
        %404 = vmatprep.subr.mxu0 0.0
        %405 = vmatpush1.msra.mxu0 0.0
        %406 = vmatprep.subr.mxu0 0.0
        %407 = vmatpush1.msra.mxu0 0.0
        %408 = vmatprep.subr.mxu0 0.0
        %409 = vmatpush1.msra.mxu0 0.0
        %410 = vmatprep.subr.mxu0 0.0
        %411 = vmatpush1.msra.mxu0 0.0
        %412 = vmatprep.subr.mxu0 0.0
        %413 = vmatpush1.msra.mxu0 0.0
        %414 = vmatprep.subr.mxu0 0.0
        %415 = vmatpush1.msra.mxu0 0.0
        %416 = vmatprep.subr.mxu0 0.0
        %417 = vmatpush1.msra.mxu0 0.0
        %418 = vmatprep.subr.mxu0 0.0
        %419 = vmatpush1.msra.mxu0 0.0
        %420 = vmatprep.subr.mxu0 0.0
        %421 = vmatpush1.msra.mxu0 0.0
        %422 = vmatprep.subr.mxu0 0.0
        %423 = vmatpush1.msra.mxu0 0.0
        %424 = vmatprep.subr.mxu0 0.0
        %425 = vmatpush1.msra.mxu0 0.0
        %426 = vmatprep.subr.mxu0 0.0
        %427 = vmatpush1.msra.mxu0 0.0
        %428 = vmatprep.subr.mxu0 0.0
        %429 = vmatpush1.msra.mxu0 0.0
        %430 = vmatprep.subr.mxu0 0.0
        %431 = vmatpush1.msra.mxu0 0.0
        %432 = vmatprep.subr.mxu0 0.0
        %433 = vmatpush1.msra.mxu0 0.0
        %434 = vmatprep.subr.mxu0 0.0
        %435 = vmatpush1.msra.mxu0 0.0
        %436 = vmatprep.subr.mxu0 0.0
        %437 = vmatpush1.msra.mxu0 0.0
        %438 = vmatprep.mubr.f32.mxu0 0.0
        %439 = vmatmul.mubr.f32.gmra.mrb[0].mxu0 %v363
        %v440 = vpop.f32.mrb[0].mxu0
        %v441 = vadd.f32 %v344, %v440
        %v442 = vpop.f32.mrb[0].mxu0
        %v443 = vadd.f32 %v344, %v442
        %444 = vmatprep.mubr.f32.mxu0 0.0
        %445 = vmatmul.mubr.f32.gmra.mrb[0].mxu0 %v366
        %v446 = vpop.f32.mrb[0].mxu0
        %v447 = vadd.f32 %v349, %v446
        %v448 = vpop.f32.mrb[0].mxu0
        %v449 = vadd.f32 %v349, %v448
        %450 = vmatprep.mubr.f32.mxu0 0.0
        %451 = vmatmul.mubr.f32.gmra.mrb[0].mxu0 %v369
        %v452 = vpop.f32.mrb[0].mxu0
        %v453 = vadd.f32 %v354, %v452
        %v454 = vpop.f32.mrb[0].mxu0
        %v455 = vadd.f32 %v354, %v454
        %456 = vmatprep.mubr.f32.mxu0 0.0
        %457 = vmatmul.mubr.f32.gmra.mrb[0].mxu0 %v372
        %v458 = vpop.f32.mrb[0].mxu0
        %v459 = vadd.f32 %v359, %v458
        %v460 = vpop.f32.mrb[0].mxu0
        %v461 = vadd.f32 %v359, %v460
        %462 = vdwg.mxu0
        %v463 = vtanh.pop %v441
        %v464 = vtanh.pop %v443
        %v465 = vtanh.pop %v447
        %v466 = vtanh.pop %v449
        %v467 = vtanh.pop %v453
        %v468 = vtanh.pop %v455
        %v469 = vtanh.pop %v459
        %v470 = vtanh.pop %v461
        %472 = vset.pattern.permute.xlu0 0
        %473 = vperm.xlu0 %472, %v206
        %v474 = vpop.permute.xlu0 %473
        %v477 = vsel %vm361, %v197, 0
        %479 = vmatprep.subr.mxu0 %v464
        %480 = vmatpush1.msra.mxu0 %v463
        %481 = vmatprep.subr.mxu0 %v466
        %482 = vmatpush1.msra.mxu0 %v465
        %483 = vmatprep.subr.mxu0 %v468
        %484 = vmatpush1.msra.mxu0 %v467
        %485 = vmatprep.subr.mxu0 %v470
        %486 = vmatpush1.msra.mxu0 %v469
        %487 = vmatprep.subr.mxu0 0.0
        %488 = vmatpush1.msra.mxu0 0.0
        %489 = vmatprep.subr.mxu0 0.0
        %490 = vmatpush1.msra.mxu0 0.0
        %491 = vmatprep.subr.mxu0 0.0
        %492 = vmatpush1.msra.mxu0 0.0
        %493 = vmatprep.subr.mxu0 0.0
        %494 = vmatpush1.msra.mxu0 0.0
        %495 = vmatprep.subr.mxu0 0.0
        %496 = vmatpush1.msra.mxu0 0.0
        %497 = vmatprep.subr.mxu0 0.0
        %498 = vmatpush1.msra.mxu0 0.0
        %499 = vmatprep.subr.mxu0 0.0
        %500 = vmatpush1.msra.mxu0 0.0
        %501 = vmatprep.subr.mxu0 0.0
        %502 = vmatpush1.msra.mxu0 0.0
        %503 = vmatprep.subr.mxu0 0.0
        %504 = vmatpush1.msra.mxu0 0.0
        %505 = vmatprep.subr.mxu0 0.0
        %506 = vmatpush1.msra.mxu0 0.0
        %507 = vmatprep.subr.mxu0 0.0
        %508 = vmatpush1.msra.mxu0 0.0
        %509 = vmatprep.subr.mxu0 0.0
        %510 = vmatpush1.msra.mxu0 0.0
        %511 = vmatprep.subr.mxu0 0.0
        %512 = vmatpush1.msra.mxu0 0.0
        %513 = vmatprep.subr.mxu0 0.0
        %514 = vmatpush1.msra.mxu0 0.0
        %515 = vmatprep.subr.mxu0 0.0
        %516 = vmatpush1.msra.mxu0 0.0
        %517 = vmatprep.subr.mxu0 0.0
        %518 = vmatpush1.msra.mxu0 0.0
        %519 = vmatprep.subr.mxu0 0.0
        %520 = vmatpush1.msra.mxu0 0.0
        %521 = vmatprep.subr.mxu0 0.0
        %522 = vmatpush1.msra.mxu0 0.0
        %523 = vmatprep.subr.mxu0 0.0
        %524 = vmatpush1.msra.mxu0 0.0
        %525 = vmatprep.subr.mxu0 0.0
        %526 = vmatpush1.msra.mxu0 0.0
        %527 = vmatprep.subr.mxu0 0.0
        %528 = vmatpush1.msra.mxu0 0.0
        %529 = vmatprep.subr.mxu0 0.0
        %530 = vmatpush1.msra.mxu0 0.0
        %531 = vmatprep.subr.mxu0 0.0
        %532 = vmatpush1.msra.mxu0 0.0
        %533 = vmatprep.subr.mxu0 0.0
        %534 = vmatpush1.msra.mxu0 0.0
        %535 = vmatprep.subr.mxu0 0.0
        %536 = vmatpush1.msra.mxu0 0.0
        %537 = vmatprep.subr.mxu0 0.0
        %538 = vmatpush1.msra.mxu0 0.0
        %539 = vmatprep.subr.mxu0 0.0
        %540 = vmatpush1.msra.mxu0 0.0
        %541 = vmatprep.subr.mxu0 0.0
        %542 = vmatpush1.msra.mxu0 0.0
        %543 = vmatprep.mubr.f32.mxu0 0.0
        %544 = vmatmul.mubr.f32.gmra.mrb[0].mxu0 %v477
        %v545 = vpop.f32.mrb[0].mxu0
        %v546 = vadd.f32 %v474, %v545
        %v547 = vpop.f32.mrb[0].mxu0
        %v548 = vadd.f32 %v474, %v547
        %549 = vdwg.mxu0
        %v552 = vcombine.low %v546, %v548
        %v554 = vunpack.c.l.s4 1966171168
        %v555 = vunpack.c.0.s8 %v554
        %v556 = vlaneseq
        %v557 = vshrl.u32 %v556, 7
        %v558 = vsub.s32 %v555, %v557
        %v559 = vrot.slane %v552, %v558
        %v561 = vunpack.c.l.s4 1966171168
        %v562 = vunpack.c.0.s8 %v561
        %v563 = vlaneseq
        %v564 = vshrl.u32 %v563, 7
        %v565 = vsub.s32 %v562, %v564
        %v566 = vrot.slane %v559, %v565
        %v568 = vlaneseq
        %vm569 = vcmp.ge.s32.totalorder %v568, 0
        %vm570 = vcmp.lt.s32.totalorder %v568, 256
        %vm571 = vmand %vm569, %vm570
        %572 = vst.msk [vmem:[%s186] sm:$0x3] %vm571, %v566
        %s573 = sand.u32 %s96, 1
        %s574 = scalar_lea.sflag [#allocation4], %s573
        %s575 = sand.u32 %s96, 1
        %s576 = smul.addr %s575, 2
        %s577 = scalar_lea.vmem [#allocation5], %s576
        // Predicated region
        $region37: #{tpu_custom_call.1} parent=31 // pred_check
          %p578 = pneg %p106
        $region38: #{tpu_custom_call.1} parent=31 // pred_check_branch
          %580 = sbr.rel (%p578) target = $region40
        $region39: #{tpu_custom_call.1} parent=31 // pred_region
          %s581 = smul.u32 2, %s20
          %s583 = ssub.s32 32, 32
          %584 = vsyncadd %s574, %s583
          %s585 = smul.addr %s581, 16
          %s586 = scalar_lea.hbm %s3, %s585
          %s588 = sshll.u32 %s577, 4
          %s589 = int_to_ptr.vmem [resolvable:$true] %s588
          %591 = dma.vmem_to_hbm [thread:$0]  %s589, 32, %s586, %s574
        $region40: #{tpu_custom_call.1} parent=31 // pred_fallthru
          _
      $region32: #{tpu_custom_call.1} parent=5 // pred_fallthru
        _
      %p592 = scmp.le.s32.totalorder 2, %s15
      // Predicated region
      $region41: #{tpu_custom_call.1} parent=5 // pred_check
        %p593 = pneg %p592
      $region42: #{tpu_custom_call.1} parent=5 // pred_check_branch
        %595 = sbr.rel (%p593) target = $region44
      $region43: #{tpu_custom_call.1} parent=5 // pred_region
        %s596 = ssub.s32 %s15, 2
        // Predicated region
        $region45: #{tpu_custom_call.1} parent=43 // pred_check
          %p597 = pneg %p112
        $region46: #{tpu_custom_call.1} parent=43 // pred_check_branch
          %599 = sbr.rel (%p597) target = $region48
        $region47: #{tpu_custom_call.1} parent=43 // pred_region
          %s600 = sand.u32 %s97, 1
          %s601 = scalar_lea.sflag [#allocation4], %s600
          %s602 = sand.u32 %s97, 1
          %s603 = smul.addr %s602, 2
          %s604 = scalar_lea.vmem [#allocation5], %s603
          %605 = dma.done %s601, 32
        $region48: #{tpu_custom_call.1} parent=43 // pred_fallthru
          _
      $region44: #{tpu_custom_call.1} parent=5 // pred_fallthru
        _
    $region6: #{tpu_custom_call.1} parent=1 // loop_footer
      %s19 = sadd.s32 1, %s15
    $region7: #{tpu_custom_call.1} parent=1 // loop_footer_branch
      %14 = sbr.rel target = $region3
    $region8: #{tpu_custom_call.1} parent=1 // loop_exit
      _
    %606 = vsyncpa [#allocation3], 1
    %s607 = scalar_lea.sflag [#allocation3], 1
    %608 = vsyncpa %s607, 1
    %609 = vsyncpa [#allocation4], 1
    %s610 = scalar_lea.sflag [#allocation4], 1
    %611 = vsyncpa %s610, 1

</llo_original>
